<compile_context>
chip_gen: v5e
topology: v5e:2x2
jax: 0.10.0
libtpu: 0.0.40
codegen_flags: <defaults>
</compile_context>

<pallas_src>
import jax
import jax.numpy as jnp
from jax import lax
from jax.experimental import pallas as pl
from jax.experimental.pallas import tpu as pltpu

LANES = 128
SUBLANES = 8


def _chip_tuning():
    """Best-effort (max_tile_rows, vmem_limit_bytes, max_splits) per chip."""
    kind = ""
    try:
        kind = jax.devices()[0].device_kind.lower()
    except Exception:
        pass
    if "v7" in kind:
        # 3 inputs x 2 buffers x 8192x128x4B = 24 MiB; leave headroom under 64 MiB.
        return 8192, 40 * 1024 * 1024, 2
    if "v6" in kind:
        return 4096, None, 1          # 12 MiB buffers, inside 32 MiB scoped default
    if "v5p" in kind:
        return 4096, None, 1
    if "v5 lite" in kind or "v5e" in kind or "v5lite" in kind:
        return 2048, None, 1          # 6 MiB buffers, inside 16 MiB scoped default
    return 1024, None, 1              # unknown / older chips: conservative


def _make_loss_kernel(rows, tile_rows, steps_per_split, chunk_rows, has_partial):
    """Build the reduction kernel with all shape parameters baked in statically."""
    n_chunks = tile_rows // chunk_rows
    unroll = min(8, n_chunks)

    def kernel(pred_ref, targ_ref, intf_ref, out_t_ref, out_i_ref):
        c = pl.program_id(0)   # split index ("parallel"; sharded across TCs on v7x)
        k = pl.program_id(1)   # sequential reduction step ("arbitrary")

        @pl.when(k == 0)
        def _():
            out_t_ref[...] = jnp.zeros_like(out_t_ref)
            out_i_ref[...] = jnp.zeros_like(out_i_ref)

        zeros = jnp.zeros((SUBLANES, LANES), jnp.float32)

        def chunk_update(off, size, carry):
            acc_t, acc_i = carry
            p = pred_ref[pl.ds(off, size), :].astype(jnp.float32)
            dt = p - targ_ref[pl.ds(off, size), :].astype(jnp.float32)
            di = p - intf_ref[pl.ds(off, size), :].astype(jnp.float32)
            sq_t = dt * dt
            sq_i = di * di
            if size > SUBLANES:
                # Fold the chunk down to one (8,128) vreg: reshape splits the
                # sublane axis at vreg boundaries -> plain VPU adds, no XLU.
                sq_t = jnp.sum(sq_t.reshape(size // SUBLANES, SUBLANES, LANES), axis=0)
                sq_i = jnp.sum(sq_i.reshape(size // SUBLANES, SUBLANES, LANES), axis=0)
            return acc_t + sq_t, acc_i + sq_i

        def run_fast():
            # Static trip count, modest unroll; live range stays ~a few dozen vregs.
            def body(s, carry):
                off = pl.multiple_of(s * chunk_rows, chunk_rows)
                return chunk_update(off, chunk_rows, carry)
            acc_t, acc_i = lax.fori_loop(0, n_chunks, body, (zeros, zeros),
                                         unroll=unroll)
            out_t_ref[...] += acc_t
            out_i_ref[...] += acc_i

        if not has_partial:
            # Every block of the grid is fully valid: fast path only, no branches,
            # no iota/where masking.
            run_fast()
        else:
            block_start = (c * steps_per_split + k) * tile_rows
            is_full = block_start + tile_rows <= rows

            @pl.when(is_full)
            def _():
                run_fast()

            @pl.when(jnp.logical_not(is_full))
            def _():
                # Ragged last block or clamped duplicate block: loop over exactly
                # the valid 8-row strips (possibly zero), never touching the
                # over-read / stale rows of the VMEM buffer.
                valid_rows = jnp.maximum(rows - block_start, 0)
                n_strips = valid_rows // SUBLANES

                def body(s, carry):
                    off = pl.multiple_of(s * SUBLANES, SUBLANES)
                    return chunk_update(off, SUBLANES, carry)

                acc_t, acc_i = lax.fori_loop(0, n_strips, body, (zeros, zeros))
                out_t_ref[...] += acc_t
                out_i_ref[...] += acc_i

    return kernel


def custom_loss(predicted, target, interference, w_mse=0.5, w_lsp=0.5,
                _tile_rows_cap=None, _force_splits=None):
    """Pallas TPU implementation of CustomLoss.forward. Returns a scalar f32."""
    n = predicted.size
    assert target.size == n and interference.size == n and n > 0

    flat_p = predicted.reshape(-1)
    flat_t = target.reshape(-1)
    flat_i = interference.reshape(-1)

    block_elems = SUBLANES * LANES              # one (8,128) tile = 1024 elements
    n_body = (n // block_elems) * block_elems
    rows = n_body // LANES                      # multiple of 8

    # Sub-tile tail (< 1024 elements): reduce in plain JAX; avoids re-materializing
    # padded HBM copies of all three inputs.
    if n_body < n:
        pt = flat_p[n_body:].astype(jnp.float32)
        tt = flat_t[n_body:].astype(jnp.float32)
        it = flat_i[n_body:].astype(jnp.float32)
        tail_t = jnp.sum((pt - tt) ** 2)
        tail_i = jnp.sum((pt - it) ** 2)
    else:
        tail_t = jnp.float32(0.0)
        tail_i = jnp.float32(0.0)

    if rows == 0:
        sum_t, sum_i = tail_t, tail_i
    else:
        max_tile_rows, vmem_limit, max_splits = _chip_tuning()
        if _tile_rows_cap is not None:
            max_tile_rows = _tile_rows_cap
        if _force_splits is not None:
            max_splits = _force_splits

        tile_rows = min(max_tile_rows, rows)            # multiple of 8
        num_blocks = pl.cdiv(rows, tile_rows)
        num_splits = max_splits if (max_splits > 1 and num_blocks >= 2) else 1
        steps_per_split = pl.cdiv(num_blocks, num_splits)
        has_partial = (num_splits * steps_per_split * tile_rows) != rows
        last_block = num_blocks - 1
        chunk_rows = 64 if tile_rows % 64 == 0 else SUBLANES

        p2 = flat_p[:n_body].reshape(rows, LANES)
        t2 = flat_t[:n_body].reshape(rows, LANES)
        i2 = flat_i[:n_body].reshape(rows, LANES)

        def in_index_map(c, k):
            # Clamp so the auto-generated DMA never walks past the array; the
            # over-read (duplicate / ragged) rows are skipped via the valid-row
            # strip count inside the kernel.
            return (jnp.minimum(c * steps_per_split + k, last_block), 0)

        in_spec = pl.BlockSpec((tile_rows, LANES), in_index_map)
        out_spec = pl.BlockSpec((None, SUBLANES, LANES), lambda c, k: (c, 0, 0))
        out_sds = jax.ShapeDtypeStruct((num_splits, SUBLANES, LANES), jnp.float32)

        kernel = _make_loss_kernel(rows, tile_rows, steps_per_split,
                                   chunk_rows, has_partial)

        part_t, part_i = pl.pallas_call(
            kernel,
            out_shape=(out_sds, out_sds),
            grid_spec=pltpu.PrefetchScalarGridSpec(
                num_scalar_prefetch=0,
                grid=(num_splits, steps_per_split),
                in_specs=[in_spec, in_spec, in_spec],
                out_specs=[out_spec, out_spec],
            ),
            compiler_params=pltpu.CompilerParams(
                dimension_semantics=("parallel", "arbitrary"),
                vmem_limit_bytes=vmem_limit,
            ),
        )(p2, t2, i2)

        sum_t = jnp.sum(part_t) + tail_t
        sum_i = jnp.sum(part_i) + tail_i

    inv_n = jnp.float32(1.0 / n)
    mse_t = sum_t * inv_n
    mse_i = sum_i * inv_n
    return w_mse * mse_t + w_lsp * (1.0 - mse_i)


def _reference(predicted, target, interference, w_mse=0.5, w_lsp=0.5):
    mse_t = jnp.mean((predicted.astype(jnp.float32) - target.astype(jnp.float32)) ** 2)
    mse_i = jnp.mean((predicted.astype(jnp.float32) - interference.astype(jnp.float32)) ** 2)
    return w_mse * mse_t + w_lsp * (1.0 - mse_i)


if __name__ == "__main__":
    key = jax.random.PRNGKey(0)

    def make(shape):
        k1, k2, k3 = jax.random.split(jax.random.fold_in(key, hash(shape) % (2**31)), 3)
        return (jax.random.normal(k1, shape, dtype=jnp.float32),
                jax.random.normal(k2, shape, dtype=jnp.float32),
                jax.random.normal(k3, shape, dtype=jnp.float32))

    # 1) Main small NCHW case (2048 elements, fully tile-aligned -> fast path only).
    p, t, i = make((2, 4, 16, 16))
    loss = jax.block_until_ready(custom_loss(p, t, i))
    ref = _reference(p, t, i)
    assert jnp.allclose(loss, ref, rtol=1e-5, atol=1e-5), (loss, ref)

    # 2) Unaligned element count (1155) -> plain-JAX tail path.
    p, t, i = make((3, 5, 7, 11))
    loss = jax.block_until_ready(custom_loss(p, t, i))
    ref = _reference(p, t, i)
    assert jnp.allclose(loss, ref, rtol=1e-5, atol=1e-5), (loss, ref)

    # 3) Force a ragged in-kernel block (rows=24, tile=16) -> pl.when partial path.
    p, t, i = make((3, 4, 16, 16))
    loss = jax.block_until_ready(custom_loss(p, t, i, _tile_rows_cap=16))
    ref = _reference(p, t, i)
    assert jnp.allclose(loss, ref, rtol=1e-5, atol=1e-5), (loss, ref)

    # 4) Force the 2-way split with an odd block count -> clamped duplicate block.
    p, t, i = make((3, 4, 16, 16))
    loss = jax.block_until_ready(custom_loss(p, t, i, _tile_rows_cap=8, _force_splits=2))
    ref = _reference(p, t, i)
    assert jnp.allclose(loss, ref, rtol=1e-5, atol=1e-5), (loss, ref)

    print("KERNEL_OK")
</pallas_src>

<mosaic_0001>
module attributes {stable_mosaic.version = 11 : i64} {
  func.func @kernel(%arg0: i32, %arg1: i32, %arg2: memref<16x128xf32, #tpu.memory_space<vmem>>, %arg3: memref<16x128xf32, #tpu.memory_space<vmem>>, %arg4: memref<16x128xf32, #tpu.memory_space<vmem>>, %arg5: memref<1x8x128xf32, #tpu.memory_space<vmem>>, %arg6: memref<1x8x128xf32, #tpu.memory_space<vmem>>) attributes {dimension_semantics = [#tpu.dimension_semantics<parallel>, #tpu.dimension_semantics<arbitrary>], iteration_bounds = array<i64: 1, 1>, scalar_prefetch = 0 : i64, scratch_operands = 0 : i64, tpu.core_type = #tpu.core_type<tc>, window_params = [{transform_indices = @transform_0, window_bounds = array<i64: 16, 128>}, {transform_indices = @transform_1, window_bounds = array<i64: 16, 128>}, {transform_indices = @transform_2, window_bounds = array<i64: 16, 128>}, {transform_indices = @transform_3, window_bounds = array<i64: 1, 8, 128>}, {transform_indices = @transform_4, window_bounds = array<i64: 1, 8, 128>}]} {
    %c0_i32 = arith.constant 0 : i32
    %0 = arith.cmpi eq, %arg1, %c0_i32 : i32
    %1 = arith.extui %0 : i1 to i32
    %c0_i32_0 = arith.constant 0 : i32
    %2 = arith.cmpi ne, %1, %c0_i32_0 : i32
    scf.if %2 {
      %cst_20 = arith.constant 0.000000e+00 : f32
      %44 = vector.broadcast %cst_20 : f32 to vector<8x128xf32>
      %c0_21 = arith.constant 0 : index
      %c0_22 = arith.constant 0 : index
      %c0_23 = arith.constant 0 : index
      %45 = vector.load %arg5[%c0_21, %c0_22, %c0_23] : memref<1x8x128xf32, #tpu.memory_space<vmem>>, vector<1x8x128xf32>
      %46 = vector.shape_cast %45 : vector<1x8x128xf32> to vector<8x128xf32>
      %47 = vector.shape_cast %44 : vector<8x128xf32> to vector<1x8x128xf32>
      tpu.vector_store %arg5[%c0_21, %c0_22, %c0_23], %47 {strides = array<i32>} : memref<1x8x128xf32, #tpu.memory_space<vmem>>, vector<1x8x128xf32>,
      %cst_24 = arith.constant 0.000000e+00 : f32
      %48 = vector.broadcast %cst_24 : f32 to vector<8x128xf32>
      %c0_25 = arith.constant 0 : index
      %c0_26 = arith.constant 0 : index
      %c0_27 = arith.constant 0 : index
      %49 = vector.load %arg6[%c0_25, %c0_26, %c0_27] : memref<1x8x128xf32, #tpu.memory_space<vmem>>, vector<1x8x128xf32>
      %50 = vector.shape_cast %49 : vector<1x8x128xf32> to vector<8x128xf32>
      %51 = vector.shape_cast %48 : vector<8x128xf32> to vector<1x8x128xf32>
      tpu.vector_store %arg6[%c0_25, %c0_26, %c0_27], %51 {strides = array<i32>} : memref<1x8x128xf32, #tpu.memory_space<vmem>>, vector<1x8x128xf32>,
    } else {
    }
    %cst = arith.constant 0.000000e+00 : f32
    %3 = vector.broadcast %cst : f32 to vector<8x128xf32>
    %c0_i32_1 = arith.constant 0 : i32
    %c8_i32 = arith.constant 8 : i32
    %4 = arith.muli %c0_i32_1, %c8_i32 : i32
    %5 = tpu.assume_multiple %4, 8 : i32
    %6 = arith.index_cast %5 : i32 to index
    %c0 = arith.constant 0 : index
    %7 = vector.load %arg2[%6, %c0] : memref<16x128xf32, #tpu.memory_space<vmem>>, vector<8x128xf32>
    %8 = arith.index_cast %5 : i32 to index
    %c0_2 = arith.constant 0 : index
    %9 = vector.load %arg3[%8, %c0_2] : memref<16x128xf32, #tpu.memory_space<vmem>>, vector<8x128xf32>
    %10 = arith.subf %7, %9 : vector<8x128xf32>
    %11 = arith.index_cast %5 : i32 to index
    %c0_3 = arith.constant 0 : index
    %12 = vector.load %arg4[%11, %c0_3] : memref<16x128xf32, #tpu.memory_space<vmem>>, vector<8x128xf32>
    %13 = arith.subf %7, %12 : vector<8x128xf32>
    %14 = arith.mulf %10, %10 : vector<8x128xf32>
    %15 = arith.mulf %13, %13 : vector<8x128xf32>
    %16 = arith.addf %3, %14 : vector<8x128xf32>
    %17 = arith.addf %3, %15 : vector<8x128xf32>
    %c1_i32 = arith.constant 1 : i32
    %c8_i32_4 = arith.constant 8 : i32
    %18 = arith.muli %c1_i32, %c8_i32_4 : i32
    %19 = tpu.assume_multiple %18, 8 : i32
    %20 = arith.index_cast %19 : i32 to index
    %c0_5 = arith.constant 0 : index
    %21 = vector.load %arg2[%20, %c0_5] : memref<16x128xf32, #tpu.memory_space<vmem>>, vector<8x128xf32>
    %22 = arith.index_cast %19 : i32 to index
    %c0_6 = arith.constant 0 : index
    %23 = vector.load %arg3[%22, %c0_6] : memref<16x128xf32, #tpu.memory_space<vmem>>, vector<8x128xf32>
    %24 = arith.subf %21, %23 : vector<8x128xf32>
    %25 = arith.index_cast %19 : i32 to index
    %c0_7 = arith.constant 0 : index
    %26 = vector.load %arg4[%25, %c0_7] : memref<16x128xf32, #tpu.memory_space<vmem>>, vector<8x128xf32>
    %27 = arith.subf %21, %26 : vector<8x128xf32>
    %28 = arith.mulf %24, %24 : vector<8x128xf32>
    %29 = arith.mulf %27, %27 : vector<8x128xf32>
    %30 = arith.addf %16, %28 : vector<8x128xf32>
    %31 = arith.addf %17, %29 : vector<8x128xf32>
    %c2_i32 = arith.constant 2 : i32
    %c0_8 = arith.constant 0 : index
    %c0_9 = arith.constant 0 : index
    %c0_10 = arith.constant 0 : index
    %32 = vector.load %arg5[%c0_8, %c0_9, %c0_10] : memref<1x8x128xf32, #tpu.memory_space<vmem>>, vector<1x8x128xf32>
    %33 = vector.shape_cast %32 : vector<1x8x128xf32> to vector<8x128xf32>
    %34 = arith.addf %33, %30 : vector<8x128xf32>
    %c0_11 = arith.constant 0 : index
    %c0_12 = arith.constant 0 : index
    %c0_13 = arith.constant 0 : index
    %35 = vector.load %arg5[%c0_11, %c0_12, %c0_13] : memref<1x8x128xf32, #tpu.memory_space<vmem>>, vector<1x8x128xf32>
    %36 = vector.shape_cast %35 : vector<1x8x128xf32> to vector<8x128xf32>
    %37 = vector.shape_cast %34 : vector<8x128xf32> to vector<1x8x128xf32>
    tpu.vector_store %arg5[%c0_11, %c0_12, %c0_13], %37 {strides = array<i32>} : memref<1x8x128xf32, #tpu.memory_space<vmem>>, vector<1x8x128xf32>,
    %c0_14 = arith.constant 0 : index
    %c0_15 = arith.constant 0 : index
    %c0_16 = arith.constant 0 : index
    %38 = vector.load %arg6[%c0_14, %c0_15, %c0_16] : memref<1x8x128xf32, #tpu.memory_space<vmem>>, vector<1x8x128xf32>
    %39 = vector.shape_cast %38 : vector<1x8x128xf32> to vector<8x128xf32>
    %40 = arith.addf %39, %31 : vector<8x128xf32>
    %c0_17 = arith.constant 0 : index
    %c0_18 = arith.constant 0 : index
    %c0_19 = arith.constant 0 : index
    %41 = vector.load %arg6[%c0_17, %c0_18, %c0_19] : memref<1x8x128xf32, #tpu.memory_space<vmem>>, vector<1x8x128xf32>
    %42 = vector.shape_cast %41 : vector<1x8x128xf32> to vector<8x128xf32>
    %43 = vector.shape_cast %40 : vector<8x128xf32> to vector<1x8x128xf32>
    tpu.vector_store %arg6[%c0_17, %c0_18, %c0_19], %43 {strides = array<i32>} : memref<1x8x128xf32, #tpu.memory_space<vmem>>, vector<1x8x128xf32>,
    return
  }
  func.func @transform_0(%arg0: i32, %arg1: i32) -> (i32, i32) {
    %c1_i32 = arith.constant 1 : i32
    %0 = arith.muli %arg0, %c1_i32 : i32
    %1 = arith.addi %0, %arg1 : i32
    %c0_i32 = arith.constant 0 : i32
    %2 = arith.minsi %1, %c0_i32 : i32
    %c0_i32_0 = arith.constant 0 : i32
    %c0_i32_1 = arith.constant 0 : i32
    return %2, %c0_i32_0 : i32, i32
  }
  func.func @transform_1(%arg0: i32, %arg1: i32) -> (i32, i32) {
    %c1_i32 = arith.constant 1 : i32
    %0 = arith.muli %arg0, %c1_i32 : i32
    %1 = arith.addi %0, %arg1 : i32
    %c0_i32 = arith.constant 0 : i32
    %2 = arith.minsi %1, %c0_i32 : i32
    %c0_i32_0 = arith.constant 0 : i32
    %c0_i32_1 = arith.constant 0 : i32
    return %2, %c0_i32_0 : i32, i32
  }
  func.func @transform_2(%arg0: i32, %arg1: i32) -> (i32, i32) {
    %c1_i32 = arith.constant 1 : i32
    %0 = arith.muli %arg0, %c1_i32 : i32
    %1 = arith.addi %0, %arg1 : i32
    %c0_i32 = arith.constant 0 : i32
    %2 = arith.minsi %1, %c0_i32 : i32
    %c0_i32_0 = arith.constant 0 : i32
    %c0_i32_1 = arith.constant 0 : i32
    return %2, %c0_i32_0 : i32, i32
  }
  func.func @transform_3(%arg0: i32, %arg1: i32) -> (i32, i32, i32) {
    %c0_i32 = arith.constant 0 : i32
    %c0_i32_0 = arith.constant 0 : i32
    %c0_i32_1 = arith.constant 0 : i32
    return %arg0, %c0_i32, %c0_i32_0 : i32, i32, i32
  }
  func.func @transform_4(%arg0: i32, %arg1: i32) -> (i32, i32, i32) {
    %c0_i32 = arith.constant 0 : i32
    %c0_i32_0 = arith.constant 0 : i32
    %c0_i32_1 = arith.constant 0 : i32
    return %arg0, %c0_i32, %c0_i32_0 : i32, i32, i32
  }
}

</mosaic_0001>

<llo_original>
// kernel: tpu_custom_call.1
$region0: #{tpu_custom_call.1}
  #allocation0 [shape = 'u32[]', space=smem, size = 0x4, offset = 0x4, fixed_abs, tag = 'smem constant byte address 0x4 - core index']
  #allocation1 [shape = 'u32[72,128]{1,0:T(1,128)}', space=vmem, size = 0x9000, scoped, tag = 'internal scratch']
  %s0 = inlined_call_operand.hbm [shape: f32[16,128], index: 0, kind: input, shape index: {}]
  %s1 = inlined_call_operand.hbm [shape: f32[16,128], index: 1, kind: input, shape index: {}]
  %s2 = inlined_call_operand.hbm [shape: f32[16,128], index: 2, kind: input, shape index: {}]
  %s3 = inlined_call_operand.hbm [shape: f32[1,8,128], index: 3, kind: output, shape index: {0}]
  %s4 = inlined_call_operand.hbm [shape: f32[1,8,128], index: 4, kind: output, shape index: {1}]
  %5 = xla_tuple %s3, %s4
  %s6 = sld [smem:[#allocation0]]
  $region46: #{tpu_custom_call.1} parent=0
    _
  %s8 = ssub.s32 1, %s6
  %s9 = scalar_select 0, %s8, %s6
  $region1: #{tpu_custom_call.1} parent=0
    #allocation2 [shape = 'u8[8192]{0}', space=vmem, size = 0x2000, scoped, tag = 'input window, operand 0, single buffered']
    #allocation3 [shape = 's32[1]{0}', space=sflag, size = 0x4, scoped, tag = 'scoped memory for tpu_custom_call.1']
    #allocation4 [shape = 's32[1]{0}', space=sflag, size = 0x4, scoped, tag = 'scoped memory for tpu_custom_call.1']
    #allocation5 [shape = 'u8[8192]{0}', space=vmem, size = 0x2000, scoped, tag = 'input window, operand 1, single buffered']
    #allocation6 [shape = 's32[1]{0}', space=sflag, size = 0x4, scoped, tag = 'scoped memory for tpu_custom_call.1']
    #allocation7 [shape = 'u8[8192]{0}', space=vmem, size = 0x2000, scoped, tag = 'input window, operand 2, single buffered']
    #allocation8 [shape = 'u8[4096]{0}', space=vmem, size = 0x1000, scoped, tag = 'output window, operand 0, single buffered']
    #allocation9 [shape = 'u8[4096]{0}', space=vmem, size = 0x1000, scoped, tag = 'output window, operand 1, single buffered']
    #allocation10 [shape = 's32[1]{0}', space=sflag, size = 0x4, scoped, tag = 'scoped memory for tpu_custom_call.1']
    %10 = vsyncpa [#allocation3], 0
    %11 = vsyncpa [#allocation6], 0
    %12 = vsyncpa [#allocation4], 0
    %13 = vsyncpa [#allocation10], 0
    // Predicated region
    $region2: #{tpu_custom_call.1} parent=1 // pred_check
      _
    $region3: #{tpu_custom_call.1} parent=1 // pred_check_branch
      %15 = sbr.rel (0) target = $region5
    $region4: #{tpu_custom_call.1} parent=1 // pred_region
      %s16 = sadd.s32 0, 0
      %p17 = scmp.lt.s32.totalorder %s16, 0
      %s18 = scalar_select %p17, %s16, 0
      %s19 = smul.u32 2, %s18
      %21 = vsyncadd [#allocation3], 0
      %s22 = smul.addr %s19, 8
      %s23 = scalar_lea.hbm %s0, %s22
      %s24 = sshll.u32 %s23, 4
      %s25 = int_to_ptr.hbm [resolvable:$true] %s24
      %s26 = sshll.u32 [#allocation2], 4
      %s27 = int_to_ptr.vmem [resolvable:$true] %s26
      %32 = dma.hbm_to_vmem [thread:$0]  %s25, 256, %s27, [#allocation3], 128, 128, 8
    $region5: #{tpu_custom_call.1} parent=1 // pred_fallthru
      _
    // Predicated region
    $region6: #{tpu_custom_call.1} parent=1 // pred_check
      _
    $region7: #{tpu_custom_call.1} parent=1 // pred_check_branch
      %34 = sbr.rel (0) target = $region9
    $region8: #{tpu_custom_call.1} parent=1 // pred_region
      %s35 = sadd.s32 0, 0
      %p36 = scmp.lt.s32.totalorder %s35, 0
      %s37 = scalar_select %p36, %s35, 0
      %s38 = smul.u32 2, %s37
      %40 = vsyncadd [#allocation6], 0
      %s41 = smul.addr %s38, 8
      %s42 = scalar_lea.hbm %s1, %s41
      %s43 = sshll.u32 %s42, 4
      %s44 = int_to_ptr.hbm [resolvable:$true] %s43
      %s45 = sshll.u32 [#allocation5], 4
      %s46 = int_to_ptr.vmem [resolvable:$true] %s45
      %51 = dma.hbm_to_vmem [thread:$0]  %s44, 256, %s46, [#allocation6], 128, 128, 8
    $region9: #{tpu_custom_call.1} parent=1 // pred_fallthru
      _
    // Predicated region
    $region10: #{tpu_custom_call.1} parent=1 // pred_check
      _
    $region11: #{tpu_custom_call.1} parent=1 // pred_check_branch
      %53 = sbr.rel (0) target = $region13
    $region12: #{tpu_custom_call.1} parent=1 // pred_region
      %s54 = sadd.s32 0, 0
      %p55 = scmp.lt.s32.totalorder %s54, 0
      %s56 = scalar_select %p55, %s54, 0
      %s57 = smul.u32 2, %s56
      %59 = vsyncadd [#allocation6], 0
      %s60 = smul.addr %s57, 8
      %s61 = scalar_lea.hbm %s2, %s60
      %s62 = sshll.u32 %s61, 4
      %s63 = int_to_ptr.hbm [resolvable:$true] %s62
      %s64 = sshll.u32 [#allocation7], 4
      %s65 = int_to_ptr.vmem [resolvable:$true] %s64
      %70 = dma.hbm_to_vmem [thread:$0]  %s63, 256, %s65, [#allocation6], 128, 128, 8
    $region13: #{tpu_custom_call.1} parent=1 // pred_fallthru
      _
    // Predicated region
    $region14: #{tpu_custom_call.1} parent=1 // pred_check
      _
    $region15: #{tpu_custom_call.1} parent=1 // pred_check_branch
      %72 = sbr.rel (0) target = $region17
    $region16: #{tpu_custom_call.1} parent=1 // pred_region
      %74 = dma.done [#allocation3], 256
    $region17: #{tpu_custom_call.1} parent=1 // pred_fallthru
      _
    // Predicated region
    $region18: #{tpu_custom_call.1} parent=1 // pred_check
      _
    $region19: #{tpu_custom_call.1} parent=1 // pred_check_branch
      %76 = sbr.rel (0) target = $region21
    $region20: #{tpu_custom_call.1} parent=1 // pred_region
      %78 = dma.done [#allocation6], 256
    $region21: #{tpu_custom_call.1} parent=1 // pred_fallthru
      _
    // Predicated region
    $region22: #{tpu_custom_call.1} parent=1 // pred_check
      _
    $region23: #{tpu_custom_call.1} parent=1 // pred_check_branch
      %80 = sbr.rel (0) target = $region25
    $region24: #{tpu_custom_call.1} parent=1 // pred_region
      %82 = dma.done [#allocation6], 256
    $region25: #{tpu_custom_call.1} parent=1 // pred_fallthru
      _
    %s83 = sadd.s32 0, 0
    %p84 = scmp.lt.s32.totalorder %s83, 0
    %s85 = scalar_select %p84, %s83, 0
    %s86 = smul.u32 2, %s85
    %s87 = sadd.s32 0, 0
    %p88 = scmp.lt.s32.totalorder %s87, 0
    %s89 = scalar_select %p88, %s87, 0
    %s90 = smul.u32 2, %s89
    %s91 = sadd.s32 0, 0
    %p92 = scmp.lt.s32.totalorder %s91, 0
    %s93 = scalar_select %p92, %s91, 0
    %s94 = smul.u32 2, %s93
    %p95 = scmp.eq.s32.totalorder 0, 0
    // Predicated region
    $region26: #{tpu_custom_call.1} parent=1 // pred_check
      %p96 = pneg %p95
    $region27: #{tpu_custom_call.1} parent=1 // pred_check_branch
      %98 = sbr.rel (%p96) target = $region29
    $region28: #{tpu_custom_call.1} parent=1 // pred_region
      %99 = vst [vmem:[#allocation8] sm:$0xff] 0.0
      %100 = vst [vmem:[#allocation9] sm:$0xff] 0.0
    $region29: #{tpu_custom_call.1} parent=1 // pred_fallthru
      _
    %v101 = vld [vmem:[#allocation2] sm:$0xff]
    %v102 = vld [vmem:[#allocation5] sm:$0xff]
    %v103 = vsub.f32 %v101, %v102
    %v104 = vld [vmem:[#allocation7] sm:$0xff]
    %v105 = vsub.f32 %v101, %v104
    %v106 = vmul.f32 %v103, %v103
    %v107 = vmul.f32 %v105, %v105
    %v108 = vadd.f32 %v106, 0.0
    %v109 = vadd.f32 %v107, 0.0
    %s110 = scalar_lea.vmem [#allocation2], 8
    %v111 = vld [vmem:[%s110] sm:$0xff]
    %s112 = scalar_lea.vmem [#allocation5], 8
    %v113 = vld [vmem:[%s112] sm:$0xff]
    %v114 = vsub.f32 %v111, %v113
    %s115 = scalar_lea.vmem [#allocation7], 8
    %v116 = vld [vmem:[%s115] sm:$0xff]
    %v117 = vsub.f32 %v111, %v116
    %v118 = vmul.f32 %v114, %v114
    %v119 = vmul.f32 %v117, %v117
    %v120 = vadd.f32 %v108, %v118
    %v121 = vadd.f32 %v109, %v119
    %v122 = vld [vmem:[#allocation8] sm:$0xff]
    %v123 = vadd.f32 %v122, %v120
    %124 = vst [vmem:[#allocation8] sm:$0xff] %v123
    %v125 = vld [vmem:[#allocation9] sm:$0xff]
    %v126 = vadd.f32 %v125, %v121
    %127 = vst [vmem:[#allocation9] sm:$0xff] %v126
    // Predicated region
    $region30: #{tpu_custom_call.1} parent=1 // pred_check
      _
    $region31: #{tpu_custom_call.1} parent=1 // pred_check_branch
      %129 = sbr.rel (0) target = $region33
    $region32: #{tpu_custom_call.1} parent=1 // pred_region
      %131 = vsyncadd [#allocation4], 0
      %s133 = sshll.u32 [#allocation8], 4
      %s134 = int_to_ptr.vmem [resolvable:$true] %s133
      %s135 = sshll.u32 %s3, 4
      %s136 = int_to_ptr.hbm [resolvable:$true] %s135
      %138 = dma.vmem_to_hbm [thread:$0]  %s134, 128, %s136, [#allocation4]
    $region33: #{tpu_custom_call.1} parent=1 // pred_fallthru
      _
    // Predicated region
    $region34: #{tpu_custom_call.1} parent=1 // pred_check
      _
    $region35: #{tpu_custom_call.1} parent=1 // pred_check_branch
      %140 = sbr.rel (0) target = $region37
    $region36: #{tpu_custom_call.1} parent=1 // pred_region
      %142 = vsyncadd [#allocation10], 0
      %s144 = sshll.u32 [#allocation9], 4
      %s145 = int_to_ptr.vmem [resolvable:$true] %s144
      %s146 = sshll.u32 %s4, 4
      %s147 = int_to_ptr.hbm [resolvable:$true] %s146
      %149 = dma.vmem_to_hbm [thread:$0]  %s145, 128, %s147, [#allocation10]
    $region37: #{tpu_custom_call.1} parent=1 // pred_fallthru
      _
    // Predicated region
    $region38: #{tpu_custom_call.1} parent=1 // pred_check
      _
    $region39: #{tpu_custom_call.1} parent=1 // pred_check_branch
      %151 = sbr.rel (0) target = $region41
    $region40: #{tpu_custom_call.1} parent=1 // pred_region
      %153 = dma.done [#allocation4], 128
    $region41: #{tpu_custom_call.1} parent=1 // pred_fallthru
      _
    // Predicated region
    $region42: #{tpu_custom_call.1} parent=1 // pred_check
      _
    $region43: #{tpu_custom_call.1} parent=1 // pred_check_branch
      %155 = sbr.rel (0) target = $region45
    $region44: #{tpu_custom_call.1} parent=1 // pred_region
      %157 = dma.done [#allocation10], 128
    $region45: #{tpu_custom_call.1} parent=1 // pred_fallthru
      _
    %158 = vsyncpa [#allocation3], 1
    %159 = vsyncpa [#allocation6], 1
    %160 = vsyncpa [#allocation4], 1
    %161 = vsyncpa [#allocation10], 1

</llo_original>
